<compile_context>
chip_gen: v7x
topology: tpu7x:2x2x1
jax: 0.10.0
libtpu: 0.0.40
codegen_flags: <defaults>
</compile_context>

<pallas_src>
import functools
import math

import jax
import jax.numpy as jnp
from jax.experimental import pallas as pl
from jax.experimental.pallas import tpu as pltpu


def _rms_norm_kernel(x_ref, g_ref, o_ref, *, eps):
    """RMSNorm over the last dim of one (block_rows, dim_padded) tile.

    x_ref : (block_rows, dim_p)  input tile (VMEM)
    g_ref : (1, dim_p)           f32 gamma * sqrt(dim), same block every step
    o_ref : (block_rows, dim_p)  output tile (VMEM)
    """
    x = x_ref[...].astype(jnp.float32)
    # Per-row sum of squares -> cross-lane reduction (XLU slot has slack).
    ss = jnp.sum(x * x, axis=-1, keepdims=True)
    # 1 / max(||x||, eps) == rsqrt(max(||x||^2, eps^2)); rsqrt goes to the EUP.
    inv = jax.lax.rsqrt(jnp.maximum(ss, eps * eps))
    o_ref[...] = (x * inv * g_ref[...]).astype(o_ref.dtype)


def _vmem_capacity_bytes():
    """Physical VMEM per TensorCore; conservative v7x fallback if unknown."""
    try:
        info = pltpu.get_tpu_info()
        cap = int(getattr(info, "vmem_capacity_bytes"))
        if cap > 0:
            return cap
    except Exception:  # noqa: BLE001 - trace-time query is best-effort only
        pass
    return 64 << 20


def _pick_block_rows(rows, dim_p, itemsize, vmem_cap, target_tile_bytes=4 << 20):
    """Row-tile size: ~target_tile_bytes per input buffer, VMEM-budgeted,
    dtype-aware sublane alignment, preferring a divisor of `rows`."""
    sub = max(8, 32 // itemsize)          # f32 -> 8, bf16 -> 16, int8/fp8 -> 32
    if rows <= sub:
        return rows                       # full extent: no (8, *) constraint

    row_bytes = dim_p * itemsize
    br = max(sub, (target_tile_bytes // row_bytes) // sub * sub)

    # VMEM per step ~= 2x in + 2x out (double-buffered) + ~2 f32 temp tiles.
    def vmem_needed(b):
        return 4 * b * row_bytes + 2 * b * dim_p * 4

    budget = int(vmem_cap * 0.7)
    while br > sub and vmem_needed(br) > budget:
        br -= sub

    br = min(br, rows)
    if br == rows:
        return rows                       # single full-extent tile

    # Prefer a block that divides rows (no ragged masked last tile); search
    # down to half the target so we don't give up much tile size.
    if rows % br != 0:
        for cand in range(br, max(sub, br // 2) - 1, -sub):
            if rows % cand == 0:
                br = cand
                break
    return max(br, sub)


def rms_norm(x, gamma, *, eps=1e-12, target_tile_bytes=4 << 20):
    """x: (..., dim). gamma: (dim,). Returns same shape/dtype as x."""
    *lead, dim = x.shape
    rows = math.prod(lead) if lead else 1
    scale = float(dim) ** 0.5

    # Lane-dense feature axis: pad dim up to a multiple of 128. Zero padding
    # does not change the row norm, and we slice the pad off the output.
    dim_p = ((dim + 127) // 128) * 128
    pad = dim_p - dim

    # Metadata-only reshape; the pad (if any) is the only extra HBM traffic.
    x2 = x.reshape(rows, dim)
    if pad:
        x2 = jnp.pad(x2, ((0, 0), (0, pad)))

    # Fold sqrt(dim) into gamma once (dim floats -> negligible), keep it f32.
    g2 = gamma.astype(jnp.float32) * scale
    if pad:
        g2 = jnp.pad(g2, (0, pad))
    g2 = g2.reshape(1, dim_p)

    itemsize = jnp.dtype(x.dtype).itemsize
    vmem_cap = _vmem_capacity_bytes()
    br = _pick_block_rows(rows, dim_p, itemsize, vmem_cap, target_tile_bytes)
    grid = (pl.cdiv(rows, br),)
    # NOTE: for production benchmarking on v7x keep grid[0] >= 2 (and even) so
    # the "parallel" axis shards across both TensorCores.

    # Raise the scoped-VMEM limit to cover the chosen tile (with headroom),
    # but never above ~75% of physical VMEM (v7x only has 64 MiB per TC).
    vmem_needed = 4 * br * dim_p * itemsize + 2 * br * dim_p * 4
    vmem_limit = int(min(max(2 * vmem_needed, 32 << 20), int(vmem_cap * 0.75)))
    vmem_limit = max(vmem_limit, vmem_needed)

    cost = pl.CostEstimate(
        flops=3 * rows * dim_p,
        transcendentals=rows,
        bytes_accessed=2 * rows * dim_p * itemsize + dim_p * 4,
    )

    kernel = functools.partial(_rms_norm_kernel, eps=eps)

    out = pl.pallas_call(
        kernel,
        grid_spec=pltpu.PrefetchScalarGridSpec(
            num_scalar_prefetch=0,
            grid=grid,
            in_specs=[
                pl.BlockSpec((br, dim_p), lambda i: (i, 0)),
                pl.BlockSpec((1, dim_p), lambda i: (0, 0)),
            ],
            out_specs=pl.BlockSpec((br, dim_p), lambda i: (i, 0)),
        ),
        out_shape=jax.ShapeDtypeStruct((rows, dim_p), x.dtype),
        compiler_params=pltpu.CompilerParams(
            dimension_semantics=("parallel",),
            vmem_limit_bytes=vmem_limit,
        ),
        cost_estimate=cost,
    )(x2, g2)

    if pad:
        out = out[:, :dim]
    return out.reshape(x.shape)


def _reference(x, gamma, *, eps=1e-12):
    """Pure-JAX reference matching torch: F.normalize(x, -1) * sqrt(dim) * gamma."""
    dim = x.shape[-1]
    xf = x.astype(jnp.float32)
    norm = jnp.sqrt(jnp.sum(xf * xf, axis=-1, keepdims=True))
    return xf / jnp.maximum(norm, eps) * (dim ** 0.5) * gamma.astype(jnp.float32)


if __name__ == "__main__":
    key = jax.random.PRNGKey(0)
    kx, kg, kx2 = jax.random.split(key, 3)

    # Primary check: (batch, seq, dim) with dim NOT a multiple of 128 to
    # exercise the lane-padding path in the wrapper.
    batch, seq, dim = 2, 64, 192
    x = jax.random.normal(kx, (batch, seq, dim), dtype=jnp.float32)
    gamma = 1.0 + 0.1 * jax.random.normal(kg, (dim,), dtype=jnp.float32)

    out = jax.block_until_ready(rms_norm(x, gamma))
    ref = _reference(x, gamma)
    assert out.shape == x.shape and out.dtype == x.dtype
    assert jnp.allclose(out, ref, atol=1e-5, rtol=1e-5), "f32 mismatch vs reference"

    # Secondary sanity: lane-dense dim with bf16 I/O (f32 math in-kernel).
    dim2 = 256
    x2f = jax.random.normal(kx2, (4, 32, dim2), dtype=jnp.float32)
    gamma2 = jnp.ones((dim2,), dtype=jnp.float32)
    out2 = jax.block_until_ready(rms_norm(x2f.astype(jnp.bfloat16), gamma2))
    ref2 = _reference(x2f.astype(jnp.bfloat16), gamma2)
    assert out2.dtype == jnp.bfloat16
    assert jnp.allclose(out2.astype(jnp.float32), ref2, atol=3e-2, rtol=3e-2), \
        "bf16 mismatch vs reference"

    print("KERNEL_OK")
</pallas_src>

<mosaic_0001>
module attributes {stable_mosaic.version = 11 : i64} {
  func.func @_rms_norm_kernel(%arg0: i32, %arg1: memref<128x256xf32, #tpu.memory_space<vmem>>, %arg2: memref<1x256xf32, #tpu.memory_space<vmem>>, %arg3: memref<128x256xf32, #tpu.memory_space<vmem>>) attributes {dimension_semantics = [#tpu.dimension_semantics<parallel>], iteration_bounds = array<i64: 1>, scalar_prefetch = 0 : i64, scratch_operands = 0 : i64, tpu.core_type = #tpu.core_type<tc>, window_params = [{transform_indices = @transform_0, window_bounds = array<i64: 128, 256>}, {pipeline_mode = #tpu.pipeline_mode<synchronous>, transform_indices = @transform_1, window_bounds = array<i64: 1, 256>}, {transform_indices = @transform_2, window_bounds = array<i64: 128, 256>}]} {
    %c0 = arith.constant 0 : index
    %c0_0 = arith.constant 0 : index
    %0 = vector.load %arg1[%c0, %c0_0] : memref<128x256xf32, #tpu.memory_space<vmem>>, vector<128x256xf32>
    %1 = arith.mulf %0, %0 : vector<128x256xf32>
    %cst = arith.constant dense<0.000000e+00> : vector<128xf32>
    %2 = vector.multi_reduction <add>, %1, %cst [1] : vector<128x256xf32> to vector<128xf32>
    %3 = vector.shape_cast %2 : vector<128xf32> to vector<128x1xf32>
    %cst_1 = arith.constant 1.000000e-24 : f32
    %4 = vector.broadcast %cst_1 : f32 to vector<128x1xf32>
    %5 = arith.maximumf %3, %4 : vector<128x1xf32>
    %6 = math.rsqrt %5 : vector<128x1xf32>
    %7 = vector.broadcast %6 : vector<128x1xf32> to vector<128x256xf32>
    %8 = arith.mulf %0, %7 : vector<128x256xf32>
    %c0_2 = arith.constant 0 : index
    %c0_3 = arith.constant 0 : index
    %9 = vector.load %arg2[%c0_2, %c0_3] : memref<1x256xf32, #tpu.memory_space<vmem>>, vector<1x256xf32>
    %10 = vector.broadcast %9 : vector<1x256xf32> to vector<128x256xf32>
    %11 = arith.mulf %8, %10 : vector<128x256xf32>
    %c0_4 = arith.constant 0 : index
    %c0_5 = arith.constant 0 : index
    %12 = vector.load %arg3[%c0_4, %c0_5] : memref<128x256xf32, #tpu.memory_space<vmem>>, vector<128x256xf32>
    tpu.vector_store %arg3[%c0_4, %c0_5], %11 {strides = array<i32>} : memref<128x256xf32, #tpu.memory_space<vmem>>, vector<128x256xf32>,
    return
  }
  func.func @transform_0(%arg0: i32) -> (i32, i32) {
    %c0_i32 = arith.constant 0 : i32
    %c0_i32_0 = arith.constant 0 : i32
    return %arg0, %c0_i32 : i32, i32
  }
  func.func @transform_1(%arg0: i32) -> (i32, i32) {
    %c0_i32 = arith.constant 0 : i32
    %c0_i32_0 = arith.constant 0 : i32
    %c0_i32_1 = arith.constant 0 : i32
    return %c0_i32, %c0_i32_0 : i32, i32
  }
  func.func @transform_2(%arg0: i32) -> (i32, i32) {
    %c0_i32 = arith.constant 0 : i32
    %c0_i32_0 = arith.constant 0 : i32
    return %arg0, %c0_i32 : i32, i32
  }
}

</mosaic_0001>

<llo_original>
// kernel: tpu_custom_call.1
$region0: #{tpu_custom_call.1}
  #allocation0 [shape = 'u32[]', space=smem, size = 0x4, offset = 0x4, fixed_abs, tag = 'smem constant byte address 0x4 - core index']
  #allocation1 [shape = 'u32[144,128]{1,0:T(1,128)}', space=vmem, size = 0x12000, scoped, tag = 'internal scratch']
  %s0 = inlined_call_operand.hbm [shape: f32[128,256], index: 0, kind: input, shape index: {}]
  %s1 = inlined_call_operand.vmem [shape: f32[1,256], index: 1, kind: input, shape index: {}]
  %s2 = inlined_call_operand.hbm [shape: f32[128,256], index: 2, kind: output, shape index: {}]
  %s3 = sld [smem:[#allocation0]]
  $region22: #{tpu_custom_call.1} parent=0
    _
  %s5 = ssub.s32 1, %s3
  %s6 = scalar_select 0, %s5, %s3
  $region1: #{tpu_custom_call.1} parent=0
    #allocation2 [shape = 'u8[131072]{0}', space=vmem, size = 0x20000, scoped, tag = 'input window, operand 0, single buffered']
    #allocation3 [shape = 's32[1]{0}', space=sflag, size = 0x4, scoped, tag = 'scoped memory for tpu_custom_call.1']
    #allocation4 [shape = 's32[1]{0}', space=sflag, size = 0x4, scoped, tag = 'scoped memory for tpu_custom_call.1']
    #allocation5 [shape = 'u8[131072]{0}', space=vmem, size = 0x20000, scoped, tag = 'output window, operand 0, single buffered']
    %7 = vsyncpa [#allocation3], 0
    %8 = vsyncpa [#allocation4], 0
    // Predicated region
    $region2: #{tpu_custom_call.1} parent=1 // pred_check
      _
    $region3: #{tpu_custom_call.1} parent=1 // pred_check_branch
      %10 = sbr.rel (0) target = $region5
    $region4: #{tpu_custom_call.1} parent=1 // pred_region
      %s12 = ssub.s32 4096, 4096
      %13 = vsyncadd [#allocation3], %s12
      %s14 = sshll.u32 [#allocation2], 4
      %s15 = int_to_ptr.vmem [resolvable:$true] %s14
      %20 = dma.hbm_to_vmem [thread:$0]  %s0, 4096, %s15, [#allocation3], 256, 256, 16
    $region5: #{tpu_custom_call.1} parent=1 // pred_fallthru
      _
    // Predicated region
    $region6: #{tpu_custom_call.1} parent=1 // pred_check
      _
    $region7: #{tpu_custom_call.1} parent=1 // pred_check_branch
      %22 = sbr.rel (0) target = $region9
    $region8: #{tpu_custom_call.1} parent=1 // pred_region
      _
    $region9: #{tpu_custom_call.1} parent=1 // pred_fallthru
      _
    // Predicated region
    $region10: #{tpu_custom_call.1} parent=1 // pred_check
      _
    $region11: #{tpu_custom_call.1} parent=1 // pred_check_branch
      %24 = sbr.rel (0) target = $region13
    $region12: #{tpu_custom_call.1} parent=1 // pred_region
      %25 = dma.done [#allocation3], 4096
    $region13: #{tpu_custom_call.1} parent=1 // pred_fallthru
      _
    %v26 = vld [vmem:[#allocation2] sm:$0xff]
    %v27 = vld [vmem:[#allocation2 + $0x8] sm:$0xff]
    %v28 = vld [vmem:[#allocation2 + $0x10] sm:$0xff]
    %v29 = vld [vmem:[#allocation2 + $0x18] sm:$0xff]
    %v30 = vld [vmem:[#allocation2 + $0x20] sm:$0xff]
    %v31 = vld [vmem:[#allocation2 + $0x28] sm:$0xff]
    %v32 = vld [vmem:[#allocation2 + $0x30] sm:$0xff]
    %v33 = vld [vmem:[#allocation2 + $0x38] sm:$0xff]
    %v34 = vld [vmem:[#allocation2 + $0x40] sm:$0xff]
    %v35 = vld [vmem:[#allocation2 + $0x48] sm:$0xff]
    %v36 = vld [vmem:[#allocation2 + $0x50] sm:$0xff]
    %v37 = vld [vmem:[#allocation2 + $0x58] sm:$0xff]
    %v38 = vld [vmem:[#allocation2 + $0x60] sm:$0xff]
    %v39 = vld [vmem:[#allocation2 + $0x68] sm:$0xff]
    %v40 = vld [vmem:[#allocation2 + $0x70] sm:$0xff]
    %v41 = vld [vmem:[#allocation2 + $0x78] sm:$0xff]
    %v42 = vld [vmem:[#allocation2 + $0x80] sm:$0xff]
    %v43 = vld [vmem:[#allocation2 + $0x88] sm:$0xff]
    %v44 = vld [vmem:[#allocation2 + $0x90] sm:$0xff]
    %v45 = vld [vmem:[#allocation2 + $0x98] sm:$0xff]
    %v46 = vld [vmem:[#allocation2 + $0xa0] sm:$0xff]
    %v47 = vld [vmem:[#allocation2 + $0xa8] sm:$0xff]
    %v48 = vld [vmem:[#allocation2 + $0xb0] sm:$0xff]
    %v49 = vld [vmem:[#allocation2 + $0xb8] sm:$0xff]
    %v50 = vld [vmem:[#allocation2 + $0xc0] sm:$0xff]
    %v51 = vld [vmem:[#allocation2 + $0xc8] sm:$0xff]
    %v52 = vld [vmem:[#allocation2 + $0xd0] sm:$0xff]
    %v53 = vld [vmem:[#allocation2 + $0xd8] sm:$0xff]
    %v54 = vld [vmem:[#allocation2 + $0xe0] sm:$0xff]
    %v55 = vld [vmem:[#allocation2 + $0xe8] sm:$0xff]
    %v56 = vld [vmem:[#allocation2 + $0xf0] sm:$0xff]
    %v57 = vld [vmem:[#allocation2 + $0xf8] sm:$0xff]
    %v58 = vmul.f32 %v26, %v26
    %v59 = vmul.f32 %v27, %v27
    %v60 = vmul.f32 %v28, %v28
    %v61 = vmul.f32 %v29, %v29
    %v62 = vmul.f32 %v30, %v30
    %v63 = vmul.f32 %v31, %v31
    %v64 = vmul.f32 %v32, %v32
    %v65 = vmul.f32 %v33, %v33
    %v66 = vmul.f32 %v34, %v34
    %v67 = vmul.f32 %v35, %v35
    %v68 = vmul.f32 %v36, %v36
    %v69 = vmul.f32 %v37, %v37
    %v70 = vmul.f32 %v38, %v38
    %v71 = vmul.f32 %v39, %v39
    %v72 = vmul.f32 %v40, %v40
    %v73 = vmul.f32 %v41, %v41
    %v74 = vmul.f32 %v42, %v42
    %v75 = vmul.f32 %v43, %v43
    %v76 = vmul.f32 %v44, %v44
    %v77 = vmul.f32 %v45, %v45
    %v78 = vmul.f32 %v46, %v46
    %v79 = vmul.f32 %v47, %v47
    %v80 = vmul.f32 %v48, %v48
    %v81 = vmul.f32 %v49, %v49
    %v82 = vmul.f32 %v50, %v50
    %v83 = vmul.f32 %v51, %v51
    %v84 = vmul.f32 %v52, %v52
    %v85 = vmul.f32 %v53, %v53
    %v86 = vmul.f32 %v54, %v54
    %v87 = vmul.f32 %v55, %v55
    %v88 = vmul.f32 %v56, %v56
    %v89 = vmul.f32 %v57, %v57
    %v90 = vadd.f32 %v58, %v59
    %91 = vadd.xlane.f32.xlu0 %v90
    %v92 = vpop.xlane.xlu0 %91
    %v93 = vadd.f32 %v60, %v61
    %94 = vadd.xlane.f32.xlu0 %v93
    %v95 = vpop.xlane.xlu0 %94
    %v96 = vadd.f32 %v62, %v63
    %97 = vadd.xlane.f32.xlu0 %v96
    %v98 = vpop.xlane.xlu0 %97
    %v99 = vadd.f32 %v64, %v65
    %100 = vadd.xlane.f32.xlu0 %v99
    %v101 = vpop.xlane.xlu0 %100
    %v102 = vadd.f32 %v66, %v67
    %103 = vadd.xlane.f32.xlu0 %v102
    %v104 = vpop.xlane.xlu0 %103
    %v105 = vadd.f32 %v68, %v69
    %106 = vadd.xlane.f32.xlu0 %v105
    %v107 = vpop.xlane.xlu0 %106
    %v108 = vadd.f32 %v70, %v71
    %109 = vadd.xlane.f32.xlu0 %v108
    %v110 = vpop.xlane.xlu0 %109
    %v111 = vadd.f32 %v72, %v73
    %112 = vadd.xlane.f32.xlu0 %v111
    %v113 = vpop.xlane.xlu0 %112
    %v114 = vadd.f32 %v74, %v75
    %115 = vadd.xlane.f32.xlu0 %v114
    %v116 = vpop.xlane.xlu0 %115
    %v117 = vadd.f32 %v76, %v77
    %118 = vadd.xlane.f32.xlu0 %v117
    %v119 = vpop.xlane.xlu0 %118
    %v120 = vadd.f32 %v78, %v79
    %121 = vadd.xlane.f32.xlu0 %v120
    %v122 = vpop.xlane.xlu0 %121
    %v123 = vadd.f32 %v80, %v81
    %124 = vadd.xlane.f32.xlu0 %v123
    %v125 = vpop.xlane.xlu0 %124
    %v126 = vadd.f32 %v82, %v83
    %127 = vadd.xlane.f32.xlu0 %v126
    %v128 = vpop.xlane.xlu0 %127
    %v129 = vadd.f32 %v84, %v85
    %130 = vadd.xlane.f32.xlu0 %v129
    %v131 = vpop.xlane.xlu0 %130
    %v132 = vadd.f32 %v86, %v87
    %133 = vadd.xlane.f32.xlu0 %v132
    %v134 = vpop.xlane.xlu0 %133
    %v135 = vadd.f32 %v88, %v89
    %136 = vadd.xlane.f32.xlu0 %v135
    %v137 = vpop.xlane.xlu0 %136
    %v138 = vmax.f32 %v92, 1e-24
    %v139 = vmax.f32 %v95, 1e-24
    %v140 = vmax.f32 %v98, 1e-24
    %v141 = vmax.f32 %v101, 1e-24
    %v142 = vmax.f32 %v104, 1e-24
    %v143 = vmax.f32 %v107, 1e-24
    %v144 = vmax.f32 %v110, 1e-24
    %v145 = vmax.f32 %v113, 1e-24
    %v146 = vmax.f32 %v116, 1e-24
    %v147 = vmax.f32 %v119, 1e-24
    %v148 = vmax.f32 %v122, 1e-24
    %v149 = vmax.f32 %v125, 1e-24
    %v150 = vmax.f32 %v128, 1e-24
    %v151 = vmax.f32 %v131, 1e-24
    %v152 = vmax.f32 %v134, 1e-24
    %v153 = vmax.f32 %v137, 1e-24
    %v154 = vrsqrt.pop %v138
    %v155 = vrsqrt.pop %v139
    %v156 = vrsqrt.pop %v140
    %v157 = vrsqrt.pop %v141
    %v158 = vrsqrt.pop %v142
    %v159 = vrsqrt.pop %v143
    %v160 = vrsqrt.pop %v144
    %v161 = vrsqrt.pop %v145
    %v162 = vrsqrt.pop %v146
    %v163 = vrsqrt.pop %v147
    %v164 = vrsqrt.pop %v148
    %v165 = vrsqrt.pop %v149
    %v166 = vrsqrt.pop %v150
    %v167 = vrsqrt.pop %v151
    %v168 = vrsqrt.pop %v152
    %v169 = vrsqrt.pop %v153
    %v170 = vmul.f32 %v26, %v154
    %v171 = vmul.f32 %v27, %v154
    %v172 = vmul.f32 %v28, %v155
    %v173 = vmul.f32 %v29, %v155
    %v174 = vmul.f32 %v30, %v156
    %v175 = vmul.f32 %v31, %v156
    %v176 = vmul.f32 %v32, %v157
    %v177 = vmul.f32 %v33, %v157
    %v178 = vmul.f32 %v34, %v158
    %v179 = vmul.f32 %v35, %v158
    %v180 = vmul.f32 %v36, %v159
    %v181 = vmul.f32 %v37, %v159
    %v182 = vmul.f32 %v38, %v160
    %v183 = vmul.f32 %v39, %v160
    %v184 = vmul.f32 %v40, %v161
    %v185 = vmul.f32 %v41, %v161
    %v186 = vmul.f32 %v42, %v162
    %v187 = vmul.f32 %v43, %v162
    %v188 = vmul.f32 %v44, %v163
    %v189 = vmul.f32 %v45, %v163
    %v190 = vmul.f32 %v46, %v164
    %v191 = vmul.f32 %v47, %v164
    %v192 = vmul.f32 %v48, %v165
    %v193 = vmul.f32 %v49, %v165
    %v194 = vmul.f32 %v50, %v166
    %v195 = vmul.f32 %v51, %v166
    %v196 = vmul.f32 %v52, %v167
    %v197 = vmul.f32 %v53, %v167
    %v198 = vmul.f32 %v54, %v168
    %v199 = vmul.f32 %v55, %v168
    %v200 = vmul.f32 %v56, %v169
    %v201 = vmul.f32 %v57, %v169
    %v202 = vld [vmem:[%s1] sm:$0x3]
    %v204 = vlaneseq
    %v205 = vshrl.u32 %v204, 7
    %v206 = vsub.s32 0, %v205
    %v207 = vrot.slane %v202, %v206
    %v208 = vlaneseq
    %v209 = vshrl.u32 %v208, 7
    %v210 = vsub.s32 1, %v209
    %v211 = vrot.slane %v202, %v210
    %v214 = vmul.f32 %v170, %v207
    %v215 = vmul.f32 %v171, %v211
    %v216 = vmul.f32 %v172, %v207
    %v217 = vmul.f32 %v173, %v211
    %v218 = vmul.f32 %v174, %v207
    %v219 = vmul.f32 %v175, %v211
    %v220 = vmul.f32 %v176, %v207
    %v221 = vmul.f32 %v177, %v211
    %v222 = vmul.f32 %v178, %v207
    %v223 = vmul.f32 %v179, %v211
    %v224 = vmul.f32 %v180, %v207
    %v225 = vmul.f32 %v181, %v211
    %v226 = vmul.f32 %v182, %v207
    %v227 = vmul.f32 %v183, %v211
    %v228 = vmul.f32 %v184, %v207
    %v229 = vmul.f32 %v185, %v211
    %v230 = vmul.f32 %v186, %v207
    %v231 = vmul.f32 %v187, %v211
    %v232 = vmul.f32 %v188, %v207
    %v233 = vmul.f32 %v189, %v211
    %v234 = vmul.f32 %v190, %v207
    %v235 = vmul.f32 %v191, %v211
    %v236 = vmul.f32 %v192, %v207
    %v237 = vmul.f32 %v193, %v211
    %v238 = vmul.f32 %v194, %v207
    %v239 = vmul.f32 %v195, %v211
    %v240 = vmul.f32 %v196, %v207
    %v241 = vmul.f32 %v197, %v211
    %v242 = vmul.f32 %v198, %v207
    %v243 = vmul.f32 %v199, %v211
    %v244 = vmul.f32 %v200, %v207
    %v245 = vmul.f32 %v201, %v211
    %246 = vst [vmem:[#allocation5] sm:$0xff] %v214
    %247 = vst [vmem:[#allocation5 + $0x8] sm:$0xff] %v215
    %248 = vst [vmem:[#allocation5 + $0x10] sm:$0xff] %v216
    %249 = vst [vmem:[#allocation5 + $0x18] sm:$0xff] %v217
    %250 = vst [vmem:[#allocation5 + $0x20] sm:$0xff] %v218
    %251 = vst [vmem:[#allocation5 + $0x28] sm:$0xff] %v219
    %252 = vst [vmem:[#allocation5 + $0x30] sm:$0xff] %v220
    %253 = vst [vmem:[#allocation5 + $0x38] sm:$0xff] %v221
    %254 = vst [vmem:[#allocation5 + $0x40] sm:$0xff] %v222
    %255 = vst [vmem:[#allocation5 + $0x48] sm:$0xff] %v223
    %256 = vst [vmem:[#allocation5 + $0x50] sm:$0xff] %v224
    %257 = vst [vmem:[#allocation5 + $0x58] sm:$0xff] %v225
    %258 = vst [vmem:[#allocation5 + $0x60] sm:$0xff] %v226
    %259 = vst [vmem:[#allocation5 + $0x68] sm:$0xff] %v227
    %260 = vst [vmem:[#allocation5 + $0x70] sm:$0xff] %v228
    %261 = vst [vmem:[#allocation5 + $0x78] sm:$0xff] %v229
    %262 = vst [vmem:[#allocation5 + $0x80] sm:$0xff] %v230
    %263 = vst [vmem:[#allocation5 + $0x88] sm:$0xff] %v231
    %264 = vst [vmem:[#allocation5 + $0x90] sm:$0xff] %v232
    %265 = vst [vmem:[#allocation5 + $0x98] sm:$0xff] %v233
    %266 = vst [vmem:[#allocation5 + $0xa0] sm:$0xff] %v234
    %267 = vst [vmem:[#allocation5 + $0xa8] sm:$0xff] %v235
    %268 = vst [vmem:[#allocation5 + $0xb0] sm:$0xff] %v236
    %269 = vst [vmem:[#allocation5 + $0xb8] sm:$0xff] %v237
    %270 = vst [vmem:[#allocation5 + $0xc0] sm:$0xff] %v238
    %271 = vst [vmem:[#allocation5 + $0xc8] sm:$0xff] %v239
    %272 = vst [vmem:[#allocation5 + $0xd0] sm:$0xff] %v240
    %273 = vst [vmem:[#allocation5 + $0xd8] sm:$0xff] %v241
    %274 = vst [vmem:[#allocation5 + $0xe0] sm:$0xff] %v242
    %275 = vst [vmem:[#allocation5 + $0xe8] sm:$0xff] %v243
    %276 = vst [vmem:[#allocation5 + $0xf0] sm:$0xff] %v244
    %277 = vst [vmem:[#allocation5 + $0xf8] sm:$0xff] %v245
    // Predicated region
    $region14: #{tpu_custom_call.1} parent=1 // pred_check
      _
    $region15: #{tpu_custom_call.1} parent=1 // pred_check_branch
      %279 = sbr.rel (0) target = $region17
    $region16: #{tpu_custom_call.1} parent=1 // pred_region
      %s281 = ssub.s32 4096, 4096
      %282 = vsyncadd [#allocation4], %s281
      %s283 = sshll.u32 [#allocation5], 4
      %s284 = int_to_ptr.vmem [resolvable:$true] %s283
      %289 = dma.vmem_to_hbm [thread:$0]  %s284, 4096, %s2, [#allocation4], 256, 256, 16
    $region17: #{tpu_custom_call.1} parent=1 // pred_fallthru
      _
    // Predicated region
    $region18: #{tpu_custom_call.1} parent=1 // pred_check
      _
    $region19: #{tpu_custom_call.1} parent=1 // pred_check_branch
      %291 = sbr.rel (0) target = $region21
    $region20: #{tpu_custom_call.1} parent=1 // pred_region
      %292 = dma.done [#allocation4], 4096
    $region21: #{tpu_custom_call.1} parent=1 // pred_fallthru
      _
    %293 = vsyncpa [#allocation3], 1
    %294 = vsyncpa [#allocation4], 1

</llo_original>
